<compile_context>
chip_gen: v7x
topology: tpu7x:2x2x1
jax: 0.10.0
libtpu: 0.0.40
codegen_flags: <defaults>
</compile_context>

<pallas_src>
import functools

import jax
import jax.numpy as jnp
from jax.experimental import pallas as pl
from jax.experimental.pallas import tpu as pltpu

# Fixed init values of the module's fuse_kernel parameter.
_FUSE_W = (6.0 / 10, 3.0 / 10, 1.0 / 10)


def _boundary_loss_kernel(gt_ref, logit_ref, out_ref, *, H, W):
    g = gt_ref[0].astype(jnp.float32)      # (H, W) gt mask in {0, 1}
    x = logit_ref[0]                       # (H, W) boundary logits (f32)

    row = jax.lax.broadcasted_iota(jnp.int32, (H, W), 0)
    col = jax.lax.broadcasted_iota(jnp.int32, (H, W), 1)

    # 3x3 Laplacian conv, padding=1, via a separable box sum with zero halo:
    #   conv = 9*center - sum_{3x3 box}.
    g_im1 = jnp.where(row == 0, 0.0, pltpu.roll(g, shift=1, axis=0))          # g[i-1, j]
    g_ip1 = jnp.where(row == H - 1, 0.0, pltpu.roll(g, shift=H - 1, axis=0))  # g[i+1, j]
    v = g + g_im1 + g_ip1                                                     # vertical 3-sum
    v_jm1 = jnp.where(col == 0, 0.0, pltpu.roll(v, shift=1, axis=1))          # v[i, j-1]
    v_jp1 = jnp.where(col == W - 1, 0.0, pltpu.roll(v, shift=W - 1, axis=1))  # v[i, j+1]
    box = v + v_jm1 + v_jp1
    conv_full = 9.0 * g - box

    # boundary_targets: clamp(min=0) then strict > 0.1 threshold.
    t0 = jnp.where(jnp.maximum(conv_full, 0.0) > 0.1, 1.0, 0.0)

    # stride-2 conv + nearest upsample + threshold == t0[i - i%2, j - j%2].
    t0_r = jnp.where(row % 2 == 1, pltpu.roll(t0, shift=1, axis=0), t0)
    t2 = jnp.where(col % 2 == 1, pltpu.roll(t0_r, shift=1, axis=1), t0_r)

    # 1x1 fuse conv (0.6, 0.3, 0.1) + strict > 0.1 threshold == max(t0, t2);
    # the 0.1 * t4 contribution can never push the sum above 0.1 on its own.
    target = jnp.maximum(t0, t2)

    # BCE-with-logits and sigmoid sharing a single exp(-|x|).
    e = jnp.exp(-jnp.abs(x))
    bce = jnp.maximum(x, 0.0) - x * target + jnp.log(1.0 + e)
    r = pl.reciprocal(1.0 + e, approx=True)       # EUP approximate reciprocal
    p = jnp.where(x >= 0.0, r, e * r)             # sigmoid(x)

    bce_sum = jnp.sum(bce)
    inter = jnp.sum(p * target)
    p_sum = jnp.sum(p)
    t_sum = jnp.sum(target)

    # Pack the four per-sample sums into rows 0..3 of a lane-dense (8, 128)
    # tile so the output store is a single unmasked full-vreg store.
    lane_row = jax.lax.broadcasted_iota(jnp.int32, (8, 128), 0)
    tile = jnp.where(lane_row == 0, bce_sum,
           jnp.where(lane_row == 1, inter,
           jnp.where(lane_row == 2, p_sum,
           jnp.where(lane_row == 3, t_sum, 0.0))))
    out_ref[0] = tile


def boundary_loss(boundary_logits, gtmasks):
    """boundary_logits: (N, 1, H, W) f32 ; gtmasks: (N, H, W)."""
    N, C, H, W = boundary_logits.shape
    assert C == 1
    # The kernel's target == max(t0, t2) simplification is only valid for the
    # module's fixed fuse-kernel init values.
    assert _FUSE_W == (0.6, 0.3, 0.1)

    logits = boundary_logits[:, 0].astype(jnp.float32)   # (N, H, W) f32
    gt = gtmasks.astype(jnp.bfloat16)                    # {0,1} -> lossless bf16

    sums_tile = pl.pallas_call(
        functools.partial(_boundary_loss_kernel, H=H, W=W),
        out_shape=jax.ShapeDtypeStruct((N, 8, 128), jnp.float32),
        grid=(N,),
        in_specs=[
            pl.BlockSpec((1, H, W), lambda n: (n, 0, 0)),   # gt mask (bf16)
            pl.BlockSpec((1, H, W), lambda n: (n, 0, 0)),   # logits  (f32)
        ],
        out_specs=pl.BlockSpec((1, 8, 128), lambda n: (n, 0, 0)),
        compiler_params=pltpu.CompilerParams(
            dimension_semantics=("parallel",),
            vmem_limit_bytes=48 * 1024 * 1024,
        ),
    )(gt, logits)

    sums = sums_tile[:, :4, 0]            # (N, 4): bce, inter, p_sum, t_sum

    # bce: mean over all N*1*H*W elements.
    bce_loss = jnp.sum(sums[:, 0]) / (N * H * W)
    # dice: per-sample, then mean (smooth = 1.0).
    smooth = 1.0
    dice = 1.0 - (2.0 * sums[:, 1] + smooth) / (sums[:, 2] + sums[:, 3] + smooth)
    return bce_loss + jnp.mean(dice)


def _reference_loss(boundary_logits, gtmasks):
    """Pure-JAX reference reproducing the full PyTorch forward (validation)."""
    lap = jnp.array([-1, -1, -1, -1, 8, -1, -1, -1, -1], jnp.float32).reshape(1, 1, 3, 3)
    g = gtmasks[:, None].astype(jnp.float32)              # (N, 1, H, W)
    N, _, H, W = g.shape

    def conv(xx, s):
        return jax.lax.conv_general_dilated(
            xx, lap, (s, s), ((1, 1), (1, 1)),
            dimension_numbers=("NCHW", "OIHW", "NCHW"))

    def up_nearest(xx):
        h, w = xx.shape[2], xx.shape[3]
        ri = (jnp.arange(H) * h) // H
        ci = (jnp.arange(W) * w) // W
        return xx[:, :, ri][:, :, :, ci]

    bt = jnp.where(jnp.clip(conv(g, 1), 0.0) > 0.1, 1.0, 0.0)
    b2u = jnp.where(up_nearest(jnp.clip(conv(g, 2), 0.0)) > 0.1, 1.0, 0.0)
    b4u = jnp.where(up_nearest(jnp.clip(conv(g, 4), 0.0)) > 0.1, 1.0, 0.0)
    fused = (6.0 / 10) * bt + (3.0 / 10) * b2u + (1.0 / 10) * b4u
    tgt = jnp.where(fused > 0.1, 1.0, 0.0)

    x = boundary_logits.astype(jnp.float32)
    bce = jnp.mean(jnp.maximum(x, 0.0) - x * tgt + jnp.log1p(jnp.exp(-jnp.abs(x))))
    p = jax.nn.sigmoid(x).reshape(N, -1)
    t = tgt.reshape(N, -1)
    inter = jnp.sum(p * t, axis=1)
    dice = jnp.mean(1.0 - (2.0 * inter + 1.0) / (jnp.sum(p, 1) + jnp.sum(t, 1) + 1.0))
    return bce + dice


if __name__ == "__main__":
    key = jax.random.PRNGKey(0)
    k1, k2 = jax.random.split(key)
    N, H, W = 2, 16, 16
    boundary_logits = jax.random.normal(k1, (N, 1, H, W), dtype=jnp.float32)
    gtmasks = (jax.random.uniform(k2, (N, H, W)) > 0.5).astype(jnp.float32)

    loss = boundary_loss(boundary_logits, gtmasks)
    jax.block_until_ready(loss)

    ref = _reference_loss(boundary_logits, gtmasks)
    # pl.reciprocal(approx=True) adds ~1e-4 relative error to the sigmoid path;
    # tolerance is set accordingly (target/threshold math is exact).
    assert jnp.allclose(loss, ref, rtol=1e-3, atol=1e-3), (loss, ref)
    print("KERNEL_OK")
</pallas_src>

<mosaic_0001>
module attributes {stable_mosaic.version = 11 : i64} {
  func.func @_boundary_loss_kernel(%arg0: i32, %arg1: memref<1x16x16xbf16, #tpu.memory_space<vmem>>, %arg2: memref<1x16x16xf32, #tpu.memory_space<vmem>>, %arg3: memref<1x8x128xf32, #tpu.memory_space<vmem>>) attributes {dimension_semantics = [#tpu.dimension_semantics<parallel>], iteration_bounds = array<i64: 2>, scalar_prefetch = 0 : i64, scratch_operands = 0 : i64, tpu.core_type = #tpu.core_type<tc>, window_params = [{transform_indices = @transform_0, window_bounds = array<i64: 1, 16, 16>}, {transform_indices = @transform_1, window_bounds = array<i64: 1, 16, 16>}, {transform_indices = @transform_2, window_bounds = array<i64: 1, 8, 128>}]} {
    %c0 = arith.constant 0 : index
    %c0_0 = arith.constant 0 : index
    %c0_1 = arith.constant 0 : index
    %0 = vector.load %arg1[%c0, %c0_0, %c0_1] : memref<1x16x16xbf16, #tpu.memory_space<vmem>>, vector<1x16x16xbf16>
    %1 = vector.shape_cast %0 : vector<1x16x16xbf16> to vector<16x16xbf16>
    %2 = arith.extf %1 : vector<16x16xbf16> to vector<16x16xf32>
    %c0_2 = arith.constant 0 : index
    %c0_3 = arith.constant 0 : index
    %c0_4 = arith.constant 0 : index
    %3 = vector.load %arg2[%c0_2, %c0_3, %c0_4] : memref<1x16x16xf32, #tpu.memory_space<vmem>>, vector<1x16x16xf32>
    %4 = vector.shape_cast %3 : vector<1x16x16xf32> to vector<16x16xf32>
    %5 = tpu.iota {dimensions = array<i32: 0>} : vector<16x16xi32>
    %6 = tpu.iota {dimensions = array<i32: 1>} : vector<16x16xi32>
    %c0_i32 = arith.constant 0 : i32
    %7 = vector.broadcast %c0_i32 : i32 to vector<16x16xi32>
    %8 = arith.cmpi eq, %5, %7 : vector<16x16xi32>
    %c1_i32 = arith.constant 1 : i32
    %9 = tpu.dynamic_rotate %2 by %c1_i32 dim 0 : vector<16x16xf32>, i32 -> vector<16x16xf32>
    %cst = arith.constant 0.000000e+00 : f32
    %10 = vector.broadcast %cst : f32 to vector<16x16xf32>
    %11 = arith.select %8, %10, %9 : vector<16x16xi1>, vector<16x16xf32>
    %c15_i32 = arith.constant 15 : i32
    %12 = vector.broadcast %c15_i32 : i32 to vector<16x16xi32>
    %13 = arith.cmpi eq, %5, %12 : vector<16x16xi32>
    %c15_i32_5 = arith.constant 15 : i32
    %14 = tpu.dynamic_rotate %2 by %c15_i32_5 dim 0 : vector<16x16xf32>, i32 -> vector<16x16xf32>
    %cst_6 = arith.constant 0.000000e+00 : f32
    %15 = vector.broadcast %cst_6 : f32 to vector<16x16xf32>
    %16 = arith.select %13, %15, %14 : vector<16x16xi1>, vector<16x16xf32>
    %17 = arith.addf %2, %11 : vector<16x16xf32>
    %18 = arith.addf %17, %16 : vector<16x16xf32>
    %c0_i32_7 = arith.constant 0 : i32
    %19 = vector.broadcast %c0_i32_7 : i32 to vector<16x16xi32>
    %20 = arith.cmpi eq, %6, %19 : vector<16x16xi32>
    %c1_i32_8 = arith.constant 1 : i32
    %21 = tpu.dynamic_rotate %18 by %c1_i32_8 dim 1 : vector<16x16xf32>, i32 -> vector<16x16xf32>
    %cst_9 = arith.constant 0.000000e+00 : f32
    %22 = vector.broadcast %cst_9 : f32 to vector<16x16xf32>
    %23 = arith.select %20, %22, %21 : vector<16x16xi1>, vector<16x16xf32>
    %c15_i32_10 = arith.constant 15 : i32
    %24 = vector.broadcast %c15_i32_10 : i32 to vector<16x16xi32>
    %25 = arith.cmpi eq, %6, %24 : vector<16x16xi32>
    %c15_i32_11 = arith.constant 15 : i32
    %26 = tpu.dynamic_rotate %18 by %c15_i32_11 dim 1 : vector<16x16xf32>, i32 -> vector<16x16xf32>
    %cst_12 = arith.constant 0.000000e+00 : f32
    %27 = vector.broadcast %cst_12 : f32 to vector<16x16xf32>
    %28 = arith.select %25, %27, %26 : vector<16x16xi1>, vector<16x16xf32>
    %29 = arith.addf %18, %23 : vector<16x16xf32>
    %30 = arith.addf %29, %28 : vector<16x16xf32>
    %cst_13 = arith.constant 9.000000e+00 : f32
    %31 = vector.broadcast %cst_13 : f32 to vector<16x16xf32>
    %32 = arith.mulf %31, %2 : vector<16x16xf32>
    %33 = arith.subf %32, %30 : vector<16x16xf32>
    %cst_14 = arith.constant 0.000000e+00 : f32
    %34 = vector.broadcast %cst_14 : f32 to vector<16x16xf32>
    %35 = arith.maximumf %33, %34 : vector<16x16xf32>
    %cst_15 = arith.constant 1.000000e-01 : f32
    %36 = vector.broadcast %cst_15 : f32 to vector<16x16xf32>
    %37 = arith.cmpf ogt, %35, %36 : vector<16x16xf32>
    %cst_16 = arith.constant 1.000000e+00 : f32
    %cst_17 = arith.constant 0.000000e+00 : f32
    %38 = vector.broadcast %cst_16 : f32 to vector<16x16xf32>
    %39 = vector.broadcast %cst_17 : f32 to vector<16x16xf32>
    %40 = arith.select %37, %38, %39 : vector<16x16xi1>, vector<16x16xf32>
    %c2_i32 = arith.constant 2 : i32
    %c0_i32_18 = arith.constant 0 : i32
    %41 = arith.cmpi eq, %c2_i32, %c0_i32_18 : i32
    %c1_i32_19 = arith.constant 1 : i32
    %42 = arith.select %41, %c1_i32_19, %c2_i32 : i32
    %43 = vector.broadcast %42 : i32 to vector<16x16xi32>
    %44 = arith.remsi %5, %43 : vector<16x16xi32>
    %c0_i32_20 = arith.constant 0 : i32
    %45 = vector.broadcast %c0_i32_20 : i32 to vector<16x16xi32>
    %46 = arith.cmpi ne, %44, %45 : vector<16x16xi32>
    %c0_i32_21 = arith.constant 0 : i32
    %47 = vector.broadcast %c0_i32_21 : i32 to vector<16x16xi32>
    %48 = arith.cmpi slt, %44, %47 : vector<16x16xi32>
    %c0_i32_22 = arith.constant 0 : i32
    %49 = arith.cmpi slt, %42, %c0_i32_22 : i32
    %50 = vector.broadcast %49 : i1 to vector<16x16xi1>
    %51 = vector.broadcast %50 : vector<16x16xi1> to vector<16x16xi1>
    %52 = arith.xori %48, %51 : vector<16x16xi1>
    %53 = arith.andi %52, %46 : vector<16x16xi1>
    %54 = vector.broadcast %42 : i32 to vector<16x16xi32>
    %55 = arith.addi %44, %54 : vector<16x16xi32>
    %56 = arith.select %53, %55, %44 : vector<16x16xi1>, vector<16x16xi32>
    %c1_i32_23 = arith.constant 1 : i32
    %57 = vector.broadcast %c1_i32_23 : i32 to vector<16x16xi32>
    %58 = arith.cmpi eq, %56, %57 : vector<16x16xi32>
    %c1_i32_24 = arith.constant 1 : i32
    %59 = tpu.dynamic_rotate %40 by %c1_i32_24 dim 0 : vector<16x16xf32>, i32 -> vector<16x16xf32>
    %60 = arith.select %58, %59, %40 : vector<16x16xi1>, vector<16x16xf32>
    %c2_i32_25 = arith.constant 2 : i32
    %c0_i32_26 = arith.constant 0 : i32
    %61 = arith.cmpi eq, %c2_i32_25, %c0_i32_26 : i32
    %c1_i32_27 = arith.constant 1 : i32
    %62 = arith.select %61, %c1_i32_27, %c2_i32_25 : i32
    %63 = vector.broadcast %62 : i32 to vector<16x16xi32>
    %64 = arith.remsi %6, %63 : vector<16x16xi32>
    %c0_i32_28 = arith.constant 0 : i32
    %65 = vector.broadcast %c0_i32_28 : i32 to vector<16x16xi32>
    %66 = arith.cmpi ne, %64, %65 : vector<16x16xi32>
    %c0_i32_29 = arith.constant 0 : i32
    %67 = vector.broadcast %c0_i32_29 : i32 to vector<16x16xi32>
    %68 = arith.cmpi slt, %64, %67 : vector<16x16xi32>
    %c0_i32_30 = arith.constant 0 : i32
    %69 = arith.cmpi slt, %62, %c0_i32_30 : i32
    %70 = vector.broadcast %69 : i1 to vector<16x16xi1>
    %71 = vector.broadcast %70 : vector<16x16xi1> to vector<16x16xi1>
    %72 = arith.xori %68, %71 : vector<16x16xi1>
    %73 = arith.andi %72, %66 : vector<16x16xi1>
    %74 = vector.broadcast %62 : i32 to vector<16x16xi32>
    %75 = arith.addi %64, %74 : vector<16x16xi32>
    %76 = arith.select %73, %75, %64 : vector<16x16xi1>, vector<16x16xi32>
    %c1_i32_31 = arith.constant 1 : i32
    %77 = vector.broadcast %c1_i32_31 : i32 to vector<16x16xi32>
    %78 = arith.cmpi eq, %76, %77 : vector<16x16xi32>
    %c1_i32_32 = arith.constant 1 : i32
    %79 = tpu.dynamic_rotate %60 by %c1_i32_32 dim 1 : vector<16x16xf32>, i32 -> vector<16x16xf32>
    %80 = arith.select %78, %79, %60 : vector<16x16xi1>, vector<16x16xf32>
    %81 = arith.maximumf %40, %80 : vector<16x16xf32>
    %82 = math.absf %4 : vector<16x16xf32>
    %cst_33 = arith.constant 0.000000e+00 : f32
    %83 = vector.broadcast %cst_33 : f32 to vector<16x16xf32>
    %84 = arith.subf %83, %82 : vector<16x16xf32>
    %85 = math.exp %84 : vector<16x16xf32>
    %cst_34 = arith.constant 0.000000e+00 : f32
    %86 = vector.broadcast %cst_34 : f32 to vector<16x16xf32>
    %87 = arith.maximumf %4, %86 : vector<16x16xf32>
    %88 = arith.mulf %4, %81 : vector<16x16xf32>
    %89 = arith.subf %87, %88 : vector<16x16xf32>
    %cst_35 = arith.constant 1.000000e+00 : f32
    %90 = vector.broadcast %cst_35 : f32 to vector<16x16xf32>
    %91 = arith.addf %90, %85 : vector<16x16xf32>
    %92 = math.log %91 : vector<16x16xf32>
    %93 = arith.addf %89, %92 : vector<16x16xf32>
    %cst_36 = arith.constant 1.000000e+00 : f32
    %94 = vector.broadcast %cst_36 : f32 to vector<16x16xf32>
    %95 = arith.addf %94, %85 : vector<16x16xf32>
    %96 = tpu.reciprocal %95 {approx = true} : vector<16x16xf32> -> vector<16x16xf32>
    %cst_37 = arith.constant 0.000000e+00 : f32
    %97 = vector.broadcast %cst_37 : f32 to vector<16x16xf32>
    %98 = arith.cmpf oge, %4, %97 : vector<16x16xf32>
    %99 = arith.mulf %85, %96 : vector<16x16xf32>
    %100 = arith.select %98, %96, %99 : vector<16x16xi1>, vector<16x16xf32>
    %101 = vector.shape_cast %93 : vector<16x16xf32> to vector<1x16x16xf32>
    %cst_38 = arith.constant dense<0.000000e+00> : vector<1xf32>
    %102 = vector.multi_reduction <add>, %101, %cst_38 [1, 2] : vector<1x16x16xf32> to vector<1xf32>
    %103 = vector.shape_cast %102 : vector<1xf32> to vector<1x1x1xf32>
    %104 = vector.extract %103[0, 0, 0] : f32 from vector<1x1x1xf32>
    %105 = arith.mulf %100, %81 : vector<16x16xf32>
    %106 = vector.shape_cast %105 : vector<16x16xf32> to vector<1x16x16xf32>
    %cst_39 = arith.constant dense<0.000000e+00> : vector<1xf32>
    %107 = vector.multi_reduction <add>, %106, %cst_39 [1, 2] : vector<1x16x16xf32> to vector<1xf32>
    %108 = vector.shape_cast %107 : vector<1xf32> to vector<1x1x1xf32>
    %109 = vector.extract %108[0, 0, 0] : f32 from vector<1x1x1xf32>
    %110 = vector.shape_cast %100 : vector<16x16xf32> to vector<1x16x16xf32>
    %cst_40 = arith.constant dense<0.000000e+00> : vector<1xf32>
    %111 = vector.multi_reduction <add>, %110, %cst_40 [1, 2] : vector<1x16x16xf32> to vector<1xf32>
    %112 = vector.shape_cast %111 : vector<1xf32> to vector<1x1x1xf32>
    %113 = vector.extract %112[0, 0, 0] : f32 from vector<1x1x1xf32>
    %114 = vector.shape_cast %81 : vector<16x16xf32> to vector<1x16x16xf32>
    %cst_41 = arith.constant dense<0.000000e+00> : vector<1xf32>
    %115 = vector.multi_reduction <add>, %114, %cst_41 [1, 2] : vector<1x16x16xf32> to vector<1xf32>
    %116 = vector.shape_cast %115 : vector<1xf32> to vector<1x1x1xf32>
    %117 = vector.extract %116[0, 0, 0] : f32 from vector<1x1x1xf32>
    %118 = tpu.iota {dimensions = array<i32: 0>} : vector<8x128xi32>
    %c0_i32_42 = arith.constant 0 : i32
    %119 = vector.broadcast %c0_i32_42 : i32 to vector<8x128xi32>
    %120 = arith.cmpi eq, %118, %119 : vector<8x128xi32>
    %c1_i32_43 = arith.constant 1 : i32
    %121 = vector.broadcast %c1_i32_43 : i32 to vector<8x128xi32>
    %122 = arith.cmpi eq, %118, %121 : vector<8x128xi32>
    %c2_i32_44 = arith.constant 2 : i32
    %123 = vector.broadcast %c2_i32_44 : i32 to vector<8x128xi32>
    %124 = arith.cmpi eq, %118, %123 : vector<8x128xi32>
    %c3_i32 = arith.constant 3 : i32
    %125 = vector.broadcast %c3_i32 : i32 to vector<8x128xi32>
    %126 = arith.cmpi eq, %118, %125 : vector<8x128xi32>
    %cst_45 = arith.constant 0.000000e+00 : f32
    %127 = vector.broadcast %117 : f32 to vector<8x128xf32>
    %128 = vector.broadcast %cst_45 : f32 to vector<8x128xf32>
    %129 = arith.select %126, %127, %128 : vector<8x128xi1>, vector<8x128xf32>
    %130 = vector.broadcast %113 : f32 to vector<8x128xf32>
    %131 = arith.select %124, %130, %129 : vector<8x128xi1>, vector<8x128xf32>
    %132 = vector.broadcast %109 : f32 to vector<8x128xf32>
    %133 = arith.select %122, %132, %131 : vector<8x128xi1>, vector<8x128xf32>
    %134 = vector.broadcast %104 : f32 to vector<8x128xf32>
    %135 = arith.select %120, %134, %133 : vector<8x128xi1>, vector<8x128xf32>
    %c0_46 = arith.constant 0 : index
    %c0_47 = arith.constant 0 : index
    %c0_48 = arith.constant 0 : index
    %136 = vector.load %arg3[%c0_46, %c0_47, %c0_48] : memref<1x8x128xf32, #tpu.memory_space<vmem>>, vector<1x8x128xf32>
    %137 = vector.shape_cast %136 : vector<1x8x128xf32> to vector<8x128xf32>
    %138 = vector.shape_cast %135 : vector<8x128xf32> to vector<1x8x128xf32>
    tpu.vector_store %arg3[%c0_46, %c0_47, %c0_48], %138 {strides = array<i32>} : memref<1x8x128xf32, #tpu.memory_space<vmem>>, vector<1x8x128xf32>,
    return
  }
  func.func @transform_0(%arg0: i32) -> (i32, i32, i32) {
    %c0_i32 = arith.constant 0 : i32
    %c0_i32_0 = arith.constant 0 : i32
    %c0_i32_1 = arith.constant 0 : i32
    return %arg0, %c0_i32, %c0_i32_0 : i32, i32, i32
  }
  func.func @transform_1(%arg0: i32) -> (i32, i32, i32) {
    %c0_i32 = arith.constant 0 : i32
    %c0_i32_0 = arith.constant 0 : i32
    %c0_i32_1 = arith.constant 0 : i32
    return %arg0, %c0_i32, %c0_i32_0 : i32, i32, i32
  }
  func.func @transform_2(%arg0: i32) -> (i32, i32, i32) {
    %c0_i32 = arith.constant 0 : i32
    %c0_i32_0 = arith.constant 0 : i32
    %c0_i32_1 = arith.constant 0 : i32
    return %arg0, %c0_i32, %c0_i32_0 : i32, i32, i32
  }
}

</mosaic_0001>

<llo_original>
// kernel: tpu_custom_call.1
$region0: #{tpu_custom_call.1}
  #allocation0 [shape = 'u32[]', space=smem, size = 0x4, offset = 0x4, fixed_abs, tag = 'smem constant byte address 0x4 - core index']
  #allocation1 [shape = 'u32[144,128]{1,0:T(1,128)}', space=vmem, size = 0x12000, scoped, tag = 'internal scratch']
  %s0 = inlined_call_operand.hbm [shape: bf16[2,16,16], index: 0, kind: input, shape index: {}]
  %s1 = inlined_call_operand.hbm [shape: f32[2,16,16], index: 1, kind: input, shape index: {}]
  %s2 = inlined_call_operand.hbm [shape: f32[2,8,128], index: 2, kind: output, shape index: {}]
  %s3 = sld [smem:[#allocation0]]
  $region49: #{tpu_custom_call.1} parent=0
    _
  %s5 = ssub.s32 1, %s3
  %s6 = scalar_select 0, %s5, %s3
  $region1: #{tpu_custom_call.1} parent=0
    #allocation2 [shape = 'u8[8192]{0}', space=vmem, size = 0x2000, scoped, tag = 'input window, operand 0']
    #allocation3 [shape = 's32[2]{0}', space=sflag, size = 0x8, scoped, tag = 'scoped memory for tpu_custom_call.1']
    #allocation4 [shape = 's32[2]{0}', space=sflag, size = 0x8, scoped, tag = 'scoped memory for tpu_custom_call.1']
    #allocation5 [shape = 'u8[16384]{0}', space=vmem, size = 0x4000, scoped, tag = 'input window, operand 1']
    #allocation6 [shape = 's32[2]{0}', space=sflag, size = 0x8, scoped, tag = 'scoped memory for tpu_custom_call.1']
    #allocation7 [shape = 'u8[8192]{0}', space=vmem, size = 0x2000, scoped, tag = 'output window, operand 0']
    %7 = vsyncpa [#allocation3], 0
    %s8 = scalar_lea.sflag [#allocation3], 1
    %9 = vsyncpa %s8, 0
    %10 = vsyncpa [#allocation6], 0
    %s11 = scalar_lea.sflag [#allocation6], 1
    %12 = vsyncpa %s11, 0
    %13 = vsyncpa [#allocation4], 0
    %s14 = scalar_lea.sflag [#allocation4], 1
    %15 = vsyncpa %s14, 0
    loop: start=0, step=1, limit=4
    $region2: #{tpu_custom_call.1} parent=1 // loop_pre_header
      _
    $region3: #{tpu_custom_call.1} parent=1 // loop_header
      %s17 = sphi 0, %s21
      %p18 = scmp.ge.s32.totalorder %s17, 4
      %s27 = sphi 0, %s29
      %s30 = sphi 0, %s27
      %s31 = sphi 0, %s30
      %s47 = sphi 0, %s31
      %s53 = sphi 0, %s55
      %s56 = sphi 0, %s53
      %s57 = sphi 0, %s56
      %s73 = sphi 0, %s57
      %s79 = sphi 0, %s81
      %s82 = sphi 0, %s79
      %s83 = sphi 0, %s82
      %s99 = sphi 0, %s83
    $region4: #{tpu_custom_call.1} parent=1 // loop_header_branch
      %20 = sbr.rel (%p18) target = $region8
    $region5: #{tpu_custom_call.1} parent=1 // loop_body
      %s22 = ssub.s32 %s17, 1
      %s23 = ssub.s32 %s17, 2
      %s24 = sadd.s32 %s17, 1
      %s25 = ssub.s32 %s17, %s24
      %p26 = scmp.eq.s32.totalorder %s25, 0
      %s28 = sadd.s32 %s27, 1
      %s29 = scalar_select %p26, %s27, %s28
      %p32 = pneg %p26
      %p33 = scmp.eq.s32.totalorder %s17, 1
      %p34 = por %p32, %p33
      %p35 = scmp.ne.s32.totalorder %s27, %s30
      %p36 = scmp.eq.s32.totalorder %s17, 0
      %p37 = por %p35, %p36
      %p38 = scmp.ne.s32.totalorder %s27, %s30
      %p39 = scmp.eq.s32.totalorder %s22, 1
      %p40 = por %p38, %p39
      %p41 = scmp.ne.s32.totalorder %s30, %s31
      %p42 = scmp.eq.s32.totalorder %s22, 0
      %p43 = por %p41, %p42
      %p44 = scmp.ne.s32.totalorder %s30, %s31
      %p45 = scmp.eq.s32.totalorder %s23, 1
      %p46 = por %p44, %p45
      %p48 = scmp.ne.s32.totalorder %s31, %s47
      %p49 = scmp.eq.s32.totalorder %s23, 0
      %p50 = por %p48, %p49
      %s51 = ssub.s32 %s17, %s24
      %p52 = scmp.eq.s32.totalorder %s51, 0
      %s54 = sadd.s32 %s53, 1
      %s55 = scalar_select %p52, %s53, %s54
      %p58 = pneg %p52
      %p59 = scmp.eq.s32.totalorder %s17, 1
      %p60 = por %p58, %p59
      %p61 = scmp.ne.s32.totalorder %s53, %s56
      %p62 = scmp.eq.s32.totalorder %s17, 0
      %p63 = por %p61, %p62
      %p64 = scmp.ne.s32.totalorder %s53, %s56
      %p65 = scmp.eq.s32.totalorder %s22, 1
      %p66 = por %p64, %p65
      %p67 = scmp.ne.s32.totalorder %s56, %s57
      %p68 = scmp.eq.s32.totalorder %s22, 0
      %p69 = por %p67, %p68
      %p70 = scmp.ne.s32.totalorder %s56, %s57
      %p71 = scmp.eq.s32.totalorder %s23, 1
      %p72 = por %p70, %p71
      %p74 = scmp.ne.s32.totalorder %s57, %s73
      %p75 = scmp.eq.s32.totalorder %s23, 0
      %p76 = por %p74, %p75
      %s77 = ssub.s32 %s17, %s24
      %p78 = scmp.eq.s32.totalorder %s77, 0
      %s80 = sadd.s32 %s79, 1
      %s81 = scalar_select %p78, %s79, %s80
      %p84 = pneg %p78
      %p85 = scmp.eq.s32.totalorder %s17, 1
      %p86 = por %p84, %p85
      %p87 = scmp.ne.s32.totalorder %s79, %s82
      %p88 = scmp.eq.s32.totalorder %s17, 0
      %p89 = por %p87, %p88
      %p90 = scmp.ne.s32.totalorder %s79, %s82
      %p91 = scmp.eq.s32.totalorder %s22, 1
      %p92 = por %p90, %p91
      %p93 = scmp.ne.s32.totalorder %s82, %s83
      %p94 = scmp.eq.s32.totalorder %s22, 0
      %p95 = por %p93, %p94
      %p96 = scmp.ne.s32.totalorder %s82, %s83
      %p97 = scmp.eq.s32.totalorder %s23, 1
      %p98 = por %p96, %p97
      %p100 = scmp.ne.s32.totalorder %s83, %s99
      %p101 = scmp.eq.s32.totalorder %s23, 0
      %p102 = por %p100, %p101
      %p103 = scmp.le.s32.totalorder 1, %s17
      %p104 = scmp.lt.s32.totalorder %s17, 3
      %p105 = pnand %p103, %p104
      %p106 = pneg %p105
      // Predicated region
      $region9: #{tpu_custom_call.1} parent=5 // pred_check
        _
      $region10: #{tpu_custom_call.1} parent=5 // pred_check_branch
        %108 = sbr.rel (%p105) target = $region12
      $region11: #{tpu_custom_call.1} parent=5 // pred_region
        %s109 = ssub.s32 %s17, 1
      $region12: #{tpu_custom_call.1} parent=5 // pred_fallthru
        _
      %p110 = scmp.lt.s32.totalorder %s17, 2
      // Predicated region
      $region13: #{tpu_custom_call.1} parent=5 // pred_check
        %p111 = pneg %p110
      $region14: #{tpu_custom_call.1} parent=5 // pred_check_branch
        %113 = sbr.rel (%p111) target = $region16
      $region15: #{tpu_custom_call.1} parent=5 // pred_region
        // Predicated region
        $region17: #{tpu_custom_call.1} parent=15 // pred_check
          %p114 = pneg %p37
        $region18: #{tpu_custom_call.1} parent=15 // pred_check_branch
          %116 = sbr.rel (%p114) target = $region20
        $region19: #{tpu_custom_call.1} parent=15 // pred_region
          %s117 = sand.u32 %s27, 1
          %s118 = scalar_lea.sflag [#allocation3], %s117
          %s119 = sand.u32 %s27, 1
          %s120 = smul.addr %s119, 8
          %s121 = scalar_lea.vmem [#allocation2], %s120
          %s123 = ssub.s32 128, 128
          %124 = vsyncadd %s118, %s123
          %s125 = smul.addr %s17, 2
          %s126 = smul.addr %s125, 64
          %s127 = scalar_lea.hbm %s0, %s126
          %s128 = sshll.u32 %s121, 4
          %s129 = int_to_ptr.vmem [resolvable:$true] %s128
          %134 = dma.hbm_to_vmem [thread:$0]  %s127, 128, %s129, %s118, 64, 64, 4
        $region20: #{tpu_custom_call.1} parent=15 // pred_fallthru
          _
        // Predicated region
        $region21: #{tpu_custom_call.1} parent=15 // pred_check
          %p135 = pneg %p63
        $region22: #{tpu_custom_call.1} parent=15 // pred_check_branch
          %137 = sbr.rel (%p135) target = $region24
        $region23: #{tpu_custom_call.1} parent=15 // pred_region
          %s138 = sand.u32 %s53, 1
          %s139 = scalar_lea.sflag [#allocation6], %s138
          %s140 = sand.u32 %s53, 1
          %s141 = smul.addr %s140, 16
          %s142 = scalar_lea.vmem [#allocation5], %s141
          %s144 = ssub.s32 256, 256
          %145 = vsyncadd %s139, %s144
          %s146 = smul.addr %s17, 2
          %s147 = smul.addr %s146, 128
          %s148 = scalar_lea.hbm %s1, %s147
          %s149 = sshll.u32 %s142, 4
          %s150 = int_to_ptr.vmem [resolvable:$true] %s149
          %155 = dma.hbm_to_vmem [thread:$0]  %s148, 256, %s150, %s139, 128, 128, 8
        $region24: #{tpu_custom_call.1} parent=15 // pred_fallthru
          _
      $region16: #{tpu_custom_call.1} parent=5 // pred_fallthru
        _
      %p156 = scmp.le.s32.totalorder 1, %s17
      %p157 = scmp.lt.s32.totalorder %s17, 3
      %p158 = pnand %p156, %p157
      %p159 = pneg %p158
      // Predicated region
      $region25: #{tpu_custom_call.1} parent=5 // pred_check
        _
      $region26: #{tpu_custom_call.1} parent=5 // pred_check_branch
        %161 = sbr.rel (%p158) target = $region28
      $region27: #{tpu_custom_call.1} parent=5 // pred_region
        %s162 = ssub.s32 %s17, 1
        %s163 = sand.u32 %s30, 1
        %s164 = scalar_lea.sflag [#allocation3], %s163
        %s165 = sand.u32 %s30, 1
        %s166 = smul.addr %s165, 8
        %s167 = scalar_lea.vmem [#allocation2], %s166
        // Predicated region
        $region29: #{tpu_custom_call.1} parent=27 // pred_check
          %p168 = pneg %p43
        $region30: #{tpu_custom_call.1} parent=27 // pred_check_branch
          %170 = sbr.rel (%p168) target = $region32
        $region31: #{tpu_custom_call.1} parent=27 // pred_region
          %171 = dma.done %s164, 128
        $region32: #{tpu_custom_call.1} parent=27 // pred_fallthru
          _
        %s172 = sand.u32 %s56, 1
        %s173 = scalar_lea.sflag [#allocation6], %s172
        %s174 = sand.u32 %s56, 1
        %s175 = smul.addr %s174, 16
        %s176 = scalar_lea.vmem [#allocation5], %s175
        // Predicated region
        $region33: #{tpu_custom_call.1} parent=27 // pred_check
          %p177 = pneg %p69
        $region34: #{tpu_custom_call.1} parent=27 // pred_check_branch
          %179 = sbr.rel (%p177) target = $region36
        $region35: #{tpu_custom_call.1} parent=27 // pred_region
          %180 = dma.done %s173, 256
        $region36: #{tpu_custom_call.1} parent=27 // pred_fallthru
          _
        %s181 = sand.u32 %s30, 1
        %s182 = scalar_lea.sflag [#allocation3], %s181
        %s183 = sand.u32 %s30, 1
        %s184 = smul.addr %s183, 8
        %s185 = scalar_lea.vmem [#allocation2], %s184
        %p186 = pneg %p43
        %p187 = pneg %p40
        %s188 = sand.u32 %s56, 1
        %s189 = scalar_lea.sflag [#allocation6], %s188
        %s190 = sand.u32 %s56, 1
        %s191 = smul.addr %s190, 16
        %s192 = scalar_lea.vmem [#allocation5], %s191
        %p193 = pneg %p69
        %p194 = pneg %p66
        %p195 = pneg %p95
        %p196 = pneg %p92
        %s197 = sand.u32 %s82, 1
        %s198 = scalar_lea.sflag [#allocation4], %s197
        %s199 = sand.u32 %s82, 1
        %s200 = smul.addr %s199, 8
        %s201 = scalar_lea.vmem [#allocation7], %s200
        %v202 = vld [vmem:[%s167] sm:$0xf]
        %v203 = vld [vmem:[%s167 + $0x4] sm:$0xf]
        %v204 = vunpack.c.l.bf16 %v202
        %v205 = vunpack.c.l.bf16 %v203
        %v206 = vld [vmem:[%s176] sm:$0xff]
        %v207 = vld [vmem:[%s176 + $0x8] sm:$0xff]
        %v208 = vlaneseq
        %v209 = vshrl.u32 %v208, 7
        %v210 = vadd.s32 %v209, 8
        %v211 = vlaneseq
        %v212 = vand.u32 %v211, 127
        %vm213 = vcmp.eq.s32.totalorder %v209, 0
        %vm214 = vcmp.eq.s32.totalorder %v210, 0
        %v215 = vrot.slane %v204, 7
        %v216 = vrot.slane %v205, 7
        %vm217 = vcmp.lt.s32.totalorder %v209, 1
        %v218 = vsel %vm217, %v215, %v216
        %v219 = vsel %vm217, %v216, %v215
        %v220 = vsel %vm213, 0.0, %v219
        %v221 = vsel %vm214, 0.0, %v218
        %vm222 = vcmp.eq.s32.totalorder %v209, 15
        %vm223 = vcmp.eq.s32.totalorder %v210, 15
        %v224 = vrot.slane %v204, 1
        %v225 = vrot.slane %v205, 1
        %vm226 = vcmp.lt.s32.totalorder %v209, 7
        %v227 = vsel %vm226, %v224, %v225
        %v228 = vsel %vm226, %v225, %v224
        %v229 = vsel %vm222, 0.0, %v227
        %v230 = vsel %vm223, 0.0, %v228
        %v231 = vadd.f32 %v204, %v220
        %v232 = vadd.f32 %v205, %v221
        %v233 = vadd.f32 %v231, %v229
        %v234 = vadd.f32 %v232, %v230
        %vm235 = vcmp.eq.s32.totalorder %v212, 0
        %vm236 = vcmask 1047680
        %237 = vrot.lane.b32.xlu0 %v233, 16
        %v238 = vpop.permute.xlu0 %237
        %v239 = vsel %vm236, %v238, %v233
        %240 = vrot.lane.b32.xlu0 %v234, 16
        %v241 = vpop.permute.xlu0 %240
        %v242 = vsel %vm236, %v241, %v234
        %243 = vrot.lane.b32.xlu0 %v239, 16
        %v244 = vpop.permute.xlu0 %243
        %245 = vrot.lane.b32.xlu0 %v242, 16
        %v246 = vpop.permute.xlu0 %245
        %v247 = vsel %vm236, %v244, %v233
        %v248 = vsel %vm236, %v246, %v234
        %251 = vrot.lane.b32.xlu0 %v247, 113
        %v252 = vpop.permute.xlu0 %251
        %253 = vrot.lane.b32.xlu0 %v248, 113
        %v254 = vpop.permute.xlu0 %253
        %v257 = vsel %vm235, 0.0, %v252
        %v258 = vsel %vm235, 0.0, %v254
        %vm259 = vcmp.eq.s32.totalorder %v212, 15
        %260 = vrot.lane.b32.xlu0 %v247, 127
        %v261 = vpop.permute.xlu0 %260
        %262 = vrot.lane.b32.xlu0 %v248, 127
        %v263 = vpop.permute.xlu0 %262
        %v266 = vsel %vm259, 0.0, %v261
        %v267 = vsel %vm259, 0.0, %v263
        %v268 = vadd.f32 %v233, %v257
        %v269 = vadd.f32 %v234, %v258
        %v270 = vadd.f32 %v268, %v266
        %v271 = vadd.f32 %v269, %v267
        %v272 = vmul.f32 %v204, 9.0
        %v273 = vmul.f32 %v205, 9.0
        %v274 = vsub.f32 %v272, %v270
        %v275 = vsub.f32 %v273, %v271
        %v276 = vmax.f32 %v274, 0.0
        %v277 = vmax.f32 %v275, 0.0
        %vm278 = vcmp.gt.f32.partialorder %v276, 0.1
        %vm279 = vcmp.gt.f32.partialorder %v277, 0.1
        %v280 = vsel %vm278, 1.0, 0.0
        %v281 = vsel %vm279, 1.0, 0.0
        %vm282 = vcmp.lt.s32.totalorder %v209, 0
        %v283 = vsub.s32 0, %v209
        %v284 = vsel %vm282, %v283, %v209
        %v285 = vshrl.u32 %v284, 1
        %v286 = vand.u32 %v284, 1
        %v287 = vsub.s32 0, %v286
        %v288 = vsel %vm282, %v287, %v286
        %vm289 = vcmp.lt.s32.totalorder %v210, 0
        %v290 = vsub.s32 0, %v210
        %v291 = vsel %vm289, %v290, %v210
        %v292 = vshrl.u32 %v291, 1
        %v293 = vand.u32 %v291, 1
        %v294 = vsub.s32 0, %v293
        %v295 = vsel %vm289, %v294, %v293
        %vm296 = vcmp.ne.s32.totalorder %v288, 0
        %vm297 = vcmp.ne.s32.totalorder %v295, 0
        %vm298 = vcmp.lt.s32.totalorder %v288, 0
        %vm299 = vcmp.lt.s32.totalorder %v295, 0
        %vm300 = vmand %vm298, %vm296
        %vm301 = vmand %vm299, %vm297
        %v302 = vadd.s32 %v288, 2
        %v303 = vadd.s32 %v295, 2
        %v304 = vsel %vm300, %v302, %v288
        %v305 = vsel %vm301, %v303, %v295
        %vm306 = vcmp.eq.s32.totalorder %v304, 1
        %vm307 = vcmp.eq.s32.totalorder %v305, 1
        %v308 = vrot.slane %v280, 7
        %v309 = vrot.slane %v281, 7
        %v310 = vsel %vm217, %v308, %v309
        %v311 = vsel %vm217, %v309, %v308
        %v312 = vsel %vm306, %v311, %v280
        %v313 = vsel %vm307, %v310, %v281
        %vm314 = vcmp.lt.s32.totalorder %v212, 0
        %v315 = vsub.s32 0, %v212
        %v316 = vsel %vm314, %v315, %v212
        %v317 = vshrl.u32 %v316, 1
        %v318 = vand.u32 %v316, 1
        %v319 = vsub.s32 0, %v318
        %v320 = vsel %vm314, %v319, %v318
        %vm321 = vcmp.ne.s32.totalorder %v320, 0
        %vm322 = vcmp.lt.s32.totalorder %v320, 0
        %vm323 = vmand %vm322, %vm321
        %v324 = vadd.s32 %v320, 2
        %v325 = vsel %vm323, %v324, %v320
        %vm326 = vcmp.eq.s32.totalorder %v325, 1
        %327 = vrot.lane.b32.xlu0 %v312, 16
        %v328 = vpop.permute.xlu0 %327
        %v329 = vsel %vm236, %v328, %v312
        %330 = vrot.lane.b32.xlu0 %v313, 16
        %v331 = vpop.permute.xlu0 %330
        %v332 = vsel %vm236, %v331, %v313
        %333 = vrot.lane.b32.xlu0 %v329, 16
        %v334 = vpop.permute.xlu0 %333
        %335 = vrot.lane.b32.xlu0 %v332, 16
        %v336 = vpop.permute.xlu0 %335
        %v337 = vsel %vm236, %v334, %v312
        %v338 = vsel %vm236, %v336, %v313
        %341 = vrot.lane.b32.xlu0 %v337, 113
        %v342 = vpop.permute.xlu0 %341
        %343 = vrot.lane.b32.xlu0 %v338, 113
        %v344 = vpop.permute.xlu0 %343
        %v347 = vsel %vm326, %v342, %v312
        %v348 = vsel %vm326, %v344, %v313
        %v349 = vmax.f32 %v280, %v347
        %v350 = vmax.f32 %v281, %v348
        %v351 = vand.u32 2147483647, %v206
        %v352 = vand.u32 2147483647, %v207
        %v353 = vsub.f32 0.0, %v351
        %v354 = vsub.f32 0.0, %v352
        %v355 = vmul.f32 %v353, 1.442695
        %v356 = vpow.pop %v355
        %v357 = vmul.f32 %v354, 1.442695
        %v358 = vpow.pop %v357
        %v359 = vmax.f32 %v206, 0.0
        %v360 = vmax.f32 %v207, 0.0
        %v361 = vmul.f32 %v206, %v349
        %v362 = vmul.f32 %v207, %v350
        %v363 = vsub.f32 %v359, %v361
        %v364 = vsub.f32 %v360, %v362
        %v365 = vadd.f32 %v356, 1.0
        %v366 = vadd.f32 %v358, 1.0
        %v367 = vlog2.pop %v365
        %v368 = vmul.f32 %v367, 0.6931472
        %v369 = vlog2.pop %v366
        %v370 = vmul.f32 %v369, 0.6931472
        %v371 = vadd.f32 %v363, %v368
        %v372 = vadd.f32 %v364, %v370
        %v373 = vrcp.pop %v365
        %v374 = vrcp.pop %v366
        %vm375 = vcmp.ge.f32.partialorder %v206, 0.0
        %vm376 = vcmp.ge.f32.partialorder %v207, 0.0
        %v377 = vmul.f32 %v356, %v373
        %v378 = vmul.f32 %v358, %v374
        %v379 = vsel %vm375, %v373, %v377
        %v380 = vsel %vm376, %v374, %v378
        %vm381 = vcmask 130048
        %v382 = vsel %vm381, %v371, 0.0
        %v383 = vsel %vm381, %v372, 0.0
        %v384 = vadd.f32 %v382, %v383
        %385 = vadd.xlane.f32.xlu0 %v384
        %v386 = vpop.xlane.xlu0 %385
        %v387 = vrot.slane %v386, 4
        %v388 = vadd.f32 %v386, %v387
        %v389 = vrot.slane %v388, 2
        %v390 = vadd.f32 %v388, %v389
        %v391 = vrot.slane %v390, 1
        %v392 = vadd.f32 %v390, %v391
        %s393 = vtos %v392
        %v394 = vmul.f32 %v379, %v349
        %v395 = vmul.f32 %v380, %v350
        %v396 = vsel %vm381, %v394, 0.0
        %v397 = vsel %vm381, %v395, 0.0
        %v398 = vadd.f32 %v396, %v397
        %399 = vadd.xlane.f32.xlu0 %v398
        %v400 = vpop.xlane.xlu0 %399
        %v401 = vrot.slane %v400, 4
        %v402 = vadd.f32 %v400, %v401
        %v403 = vrot.slane %v402, 2
        %v404 = vadd.f32 %v402, %v403
        %v405 = vrot.slane %v404, 1
        %v406 = vadd.f32 %v404, %v405
        %s407 = vtos %v406
        %v408 = vsel %vm381, %v379, 0.0
        %v409 = vsel %vm381, %v380, 0.0
        %v410 = vadd.f32 %v408, %v409
        %411 = vadd.xlane.f32.xlu0 %v410
        %v412 = vpop.xlane.xlu0 %411
        %v413 = vrot.slane %v412, 4
        %v414 = vadd.f32 %v412, %v413
        %v415 = vrot.slane %v414, 2
        %v416 = vadd.f32 %v414, %v415
        %v417 = vrot.slane %v416, 1
        %v418 = vadd.f32 %v416, %v417
        %s419 = vtos %v418
        %v420 = vsel %vm381, %v349, 0.0
        %v421 = vsel %vm381, %v350, 0.0
        %v422 = vadd.f32 %v420, %v421
        %423 = vadd.xlane.f32.xlu0 %v422
        %v424 = vpop.xlane.xlu0 %423
        %v425 = vrot.slane %v424, 4
        %v426 = vadd.f32 %v424, %v425
        %v427 = vrot.slane %v426, 2
        %v428 = vadd.f32 %v426, %v427
        %v429 = vrot.slane %v428, 1
        %v430 = vadd.f32 %v428, %v429
        %s431 = vtos %v430
        %vm432 = vcmp.eq.s32.totalorder %v209, 1
        %vm433 = vcmp.eq.s32.totalorder %v209, 2
        %vm434 = vcmp.eq.s32.totalorder %v209, 3
        %v435 = vstv %s431
        %v436 = vsel %vm434, %v435, 0.0
        %v437 = vstv %s419
        %v438 = vsel %vm433, %v437, %v436
        %v439 = vstv %s407
        %v440 = vsel %vm432, %v439, %v438
        %v441 = vstv %s393
        %v442 = vsel %vm213, %v441, %v440
        %443 = vst [vmem:[%s201] sm:$0xff] %v442
        %s444 = sand.u32 %s82, 1
        %s445 = scalar_lea.sflag [#allocation4], %s444
        %s446 = sand.u32 %s82, 1
        %s447 = smul.addr %s446, 8
        %s448 = scalar_lea.vmem [#allocation7], %s447
        // Predicated region
        $region37: #{tpu_custom_call.1} parent=27 // pred_check
          %p449 = pneg %p92
        $region38: #{tpu_custom_call.1} parent=27 // pred_check_branch
          %451 = sbr.rel (%p449) target = $region40
        $region39: #{tpu_custom_call.1} parent=27 // pred_region
          %s453 = ssub.s32 128, 128
          %454 = vsyncadd %s445, %s453
          %s455 = smul.addr %s22, 128
          %s456 = scalar_lea.hbm %s2, %s455
          %s458 = sshll.u32 %s448, 4
          %s459 = int_to_ptr.vmem [resolvable:$true] %s458
          %461 = dma.vmem_to_hbm [thread:$0]  %s459, 128, %s456, %s445
        $region40: #{tpu_custom_call.1} parent=27 // pred_fallthru
          _
      $region28: #{tpu_custom_call.1} parent=5 // pred_fallthru
        _
      %p462 = scmp.le.s32.totalorder 2, %s17
      // Predicated region
      $region41: #{tpu_custom_call.1} parent=5 // pred_check
        %p463 = pneg %p462
      $region42: #{tpu_custom_call.1} parent=5 // pred_check_branch
        %465 = sbr.rel (%p463) target = $region44
      $region43: #{tpu_custom_call.1} parent=5 // pred_region
        %s466 = ssub.s32 %s17, 2
        // Predicated region
        $region45: #{tpu_custom_call.1} parent=43 // pred_check
          %p467 = pneg %p98
        $region46: #{tpu_custom_call.1} parent=43 // pred_check_branch
          %469 = sbr.rel (%p467) target = $region48
        $region47: #{tpu_custom_call.1} parent=43 // pred_region
          %s470 = sand.u32 %s83, 1
          %s471 = scalar_lea.sflag [#allocation4], %s470
          %s472 = sand.u32 %s83, 1
          %s473 = smul.addr %s472, 8
          %s474 = scalar_lea.vmem [#allocation7], %s473
          %475 = dma.done %s471, 128
        $region48: #{tpu_custom_call.1} parent=43 // pred_fallthru
          _
      $region44: #{tpu_custom_call.1} parent=5 // pred_fallthru
        _
    $region6: #{tpu_custom_call.1} parent=1 // loop_footer
      %s21 = sadd.s32 1, %s17
    $region7: #{tpu_custom_call.1} parent=1 // loop_footer_branch
      %16 = sbr.rel target = $region3
    $region8: #{tpu_custom_call.1} parent=1 // loop_exit
      _
    %476 = vsyncpa [#allocation3], 1
    %s477 = scalar_lea.sflag [#allocation3], 1
    %478 = vsyncpa %s477, 1
    %479 = vsyncpa [#allocation6], 1
    %s480 = scalar_lea.sflag [#allocation6], 1
    %481 = vsyncpa %s480, 1
    %482 = vsyncpa [#allocation4], 1
    %s483 = scalar_lea.sflag [#allocation4], 1
    %484 = vsyncpa %s483, 1

</llo_original>
